<compile_context>
chip_gen: v5e
topology: v5e:2x2
jax: 0.10.0
libtpu: 0.0.40
codegen_flags: <defaults>
</compile_context>

<pallas_src>
import numpy as np
import jax
import jax.numpy as jnp
from jax.experimental import pallas as pl
from jax.experimental.pallas import tpu as pltpu


# ----------------------------------------------------------------------------
# helpers
# ----------------------------------------------------------------------------
def _round_up(x, m):
    return (x + m - 1) // m * m


def _pick_lane_tile(hwp, n_batch, max_tl=1024):
    """Largest lane tile (multiple of 128) that divides hwp and is <= max_tl,
    preferring a plan with >= 2 total grid steps (v7x dual-TC sharding)."""
    cands = [t for t in range(128, hwp + 1, 128) if hwp % t == 0]
    tl = max(t for t in cands if t <= max_tl)
    if n_batch * (hwp // tl) < 2:
        two_step = [t for t in cands if hwp // t >= 2]
        if two_step:
            tl = max(two_step)
    return tl


# ----------------------------------------------------------------------------
# Pallas kernel: channel-major fused bottleneck
#   out(F, tl) = relu( Wt(F, C) @ X(C, tl)  +  Zt(F, Kr) @ Bt(Kr, tl)  + shift(F, 1) )
# Wt / Zt already carry the folded BN scale.  Single reduction step (K == C),
# so no accumulator scratch and no pl.when gating.
# ----------------------------------------------------------------------------
def _bottleneck_kernel(x_ref, wt_ref, bt_ref, zt_ref, shift_ref, o_ref):
    acc = jnp.dot(wt_ref[...], x_ref[0], preferred_element_type=jnp.float32)
    acc = acc + jnp.dot(zt_ref[0], bt_ref[...], preferred_element_type=jnp.float32)
    y = acc + shift_ref[...]
    o_ref[0] = jnp.maximum(y, 0.0).astype(o_ref.dtype)


def fused_bottleneck(x3, wt, bt, zt, shift_col, *, out_dtype=jnp.float32, max_tl=1024):
    """x3: (N, C, HW) bf16 (pure reshape of NCHW);  wt: (F, C) bf16 (scale-folded W^T);
    bt: (Kr, HW) bf16 (stacked upsample matrix, transposed);  zt: (N, F, Kr) bf16
    (scale-folded stage partials);  shift_col: (F, 1) f32.
    Returns (N, F, HW) out_dtype = relu(wt @ x + zt @ bt + shift)."""
    N, C, HW = x3.shape
    F, C2 = wt.shape
    Kr, HW2 = bt.shape
    assert C == C2 and HW == HW2 and zt.shape == (N, F, Kr) and shift_col.shape == (F, 1)

    # Lane-dense output: pad the spatial (lane) axis to a multiple of 128 so all
    # stores are unmasked full-vreg vst; padded lanes are sliced off below.
    HWp = _round_up(HW, 128)
    if HWp != HW:
        x3 = jnp.pad(x3, ((0, 0), (0, 0), (0, HWp - HW)))
        bt = jnp.pad(bt, ((0, 0), (0, HWp - HW)))

    tl = _pick_lane_tile(HWp, N, max_tl)
    grid = (N, HWp // tl)

    out_itemsize = jnp.dtype(out_dtype).itemsize
    # Exact per-buffer VMEM budget: every operand/output is (conservatively)
    # double-buffered by the pipeline; +4 MiB headroom for Mosaic internal
    # scratch; capped at 48 MiB so the same plan also fits v7x's 64 MiB core.
    tile_bytes = (C * tl * 2          # X tile (bf16)
                  + F * C * 2         # W^T (bf16, grid-invariant)
                  + Kr * tl * 2       # B^T tile (bf16)
                  + F * Kr * 2        # Z^T (bf16, per-batch)
                  + F * 1 * 4         # shift (f32)
                  + F * tl * out_itemsize)
    vmem_limit = int(min(2 * tile_bytes + 4 * 2**20, 48 * 2**20))

    cost = pl.CostEstimate(
        flops=int(2 * N * HWp * C * F + 2 * N * HWp * Kr * F),
        transcendentals=0,
        bytes_accessed=int(N * C * HWp * 2 + F * C * 2 + Kr * HWp * 2
                           + N * F * Kr * 2 + F * 4 + N * F * HWp * out_itemsize),
    )

    out = pl.pallas_call(
        _bottleneck_kernel,
        out_shape=jax.ShapeDtypeStruct((N, F, HWp), out_dtype),
        grid_spec=pltpu.PrefetchScalarGridSpec(
            num_scalar_prefetch=0,
            grid=grid,
            in_specs=[
                pl.BlockSpec((1, C, tl), lambda n, j: (n, 0, j)),   # X: (C, tl) per step
                pl.BlockSpec((F, C), lambda n, j: (0, 0)),          # W^T resident
                pl.BlockSpec((Kr, tl), lambda n, j: (0, j)),        # B^T lane tile
                pl.BlockSpec((1, F, Kr), lambda n, j: (n, 0, 0)),   # Z^T per batch
                pl.BlockSpec((F, 1), lambda n, j: (0, 0)),          # shift resident
            ],
            out_specs=pl.BlockSpec((1, F, tl), lambda n, j: (n, 0, j)),
        ),
        compiler_params=pltpu.CompilerParams(
            dimension_semantics=("parallel", "parallel"),
            vmem_limit_bytes=vmem_limit,
        ),
        cost_estimate=cost,
    )(x3, wt, bt, zt, shift_col)
    return out[:, :, :HW]


# ----------------------------------------------------------------------------
# Exact PyTorch adaptive-avg-pool and bilinear(align_corners=True) matrices.
# (Static numpy — built at trace time, folded into constants.)
# ----------------------------------------------------------------------------
def adaptive_pool_matrix(in_size, out_size):
    P = np.zeros((out_size, in_size), np.float32)
    for i in range(out_size):
        start = (i * in_size) // out_size
        end = -((-(i + 1) * in_size) // out_size)  # ceil((i+1)*in/out)
        P[i, start:end] = 1.0 / (end - start)
    return P


def bilinear_matrix(in_size, out_size):
    A = np.zeros((out_size, in_size), np.float32)
    if in_size == 1:
        A[:, 0] = 1.0
        return A
    for i in range(out_size):
        src = i * (in_size - 1) / (out_size - 1) if out_size > 1 else 0.0
        i0 = min(int(np.floor(src)), in_size - 2)
        frac = src - i0
        A[i, i0] += 1.0 - frac
        A[i, i0 + 1] += frac
    return A


# ----------------------------------------------------------------------------
# PSPModule parameters (deterministic synthetic init, inference-folded BN).
# ----------------------------------------------------------------------------
def init_psp_params(key, in_features, out_features, sizes):
    eps = 1e-5

    def bn_fold(kg, kb, c):
        gamma = 1.0 + 0.1 * jax.random.normal(kg, (c,), jnp.float32)
        beta = 0.05 * jax.random.normal(kb, (c,), jnp.float32)
        mean = jnp.zeros((c,), jnp.float32)      # running stats (inference BN)
        var = jnp.ones((c,), jnp.float32)
        scale = gamma / jnp.sqrt(var + eps)
        shift = beta - mean * scale
        return scale.reshape(1, c), shift.reshape(1, c)

    params = {"stages": []}
    c_mid = in_features // 4
    for _ in sizes:
        key, kw, kg, kb = jax.random.split(key, 4)
        w = jax.random.normal(kw, (in_features, c_mid), jnp.float32) / np.sqrt(in_features)
        scale, shift = bn_fold(kg, kb, c_mid)
        params["stages"].append((w, scale, shift))

    # Concat width: 4 stages of C/4 plus the raw feats (= in_features*(len(sizes)//4+1)).
    c_cat = len(sizes) * c_mid + in_features
    key, kw, kg, kb = jax.random.split(key, 4)
    params["bottleneck_w"] = jax.random.normal(kw, (c_cat, out_features), jnp.float32) / np.sqrt(c_cat)
    params["bottleneck_scale"], params["bottleneck_shift"] = bn_fold(kg, kb, out_features)
    return params


# ----------------------------------------------------------------------------
# PSP forward (channel-major, transpose-free hot path).
# ----------------------------------------------------------------------------
def psp_forward(feats, params, sizes=(1, 2, 3, 6), out_dtype=jnp.float32, max_tl=1024):
    """feats: NCHW float32.  Returns NCHW (out_features channels) in out_dtype."""
    Nb, C, H, W = feats.shape
    HW = H * W
    c_mid = C // 4
    out_f = params["bottleneck_w"].shape[1]
    scale = params["bottleneck_scale"]        # (1, out_f)
    shift = params["bottleneck_shift"]        # (1, out_f)

    # One bf16 cast of the big activation, reused by the stage einsums and the
    # Pallas kernel.  No NCHW<->NHWC transposes anywhere on the hot path.
    feats_bf = feats.astype(jnp.bfloat16)                     # (N, C, H, W)

    # Bottleneck weight split by concat order: [stage_1..stage_4 (C/4 each), feats (C)].
    wb = params["bottleneck_w"]
    wb_stage = [wb[i * c_mid:(i + 1) * c_mid] for i in range(len(sizes))]
    wb_feats = wb[len(sizes) * c_mid:]                         # (C, out_f)

    # ---- tiny stage path (<= N*36 rows per stage), plain JAX ----------------
    # Each stage's slice of the bottleneck weight is applied BEFORE the bilinear
    # upsample (a channel matmul commutes with the linear spatial resample); the
    # upsample itself moves into the kernel via a stacked (HW, 50) matrix B.
    z_parts = []
    b_cols = []
    for idx, (s, (w_s, scale_s, shift_s)) in enumerate(zip(sizes, params["stages"])):
        Ph = adaptive_pool_matrix(H, s)                        # (s, H)
        Pw = adaptive_pool_matrix(W, s)                        # (s, W)
        pooled = jnp.einsum("nchw,ph,qw->npqc", feats_bf, Ph, Pw)      # (N, s, s, C) f32
        y = jnp.maximum(pooled.reshape(-1, C) @ w_s * scale_s + shift_s, 0.0)
        z = (y @ wb_stage[idx]).reshape(Nb, s * s, out_f)      # bottleneck slice
        z_parts.append(z)
        Ah = bilinear_matrix(s, H)                             # (H, s)
        Aw = bilinear_matrix(s, W)                             # (W, s)
        b_cols.append(np.kron(Ah, Aw))                         # (H*W, s*s)

    z_cat = jnp.concatenate(z_parts, axis=1)                   # (N, Kr, out_f), Kr = 50
    B = np.concatenate(b_cols, axis=1)                         # (HW, Kr), static

    # Fold the BN scale into the weights / residual; only shift enters the kernel.
    wt = (wb_feats * scale).T.astype(jnp.bfloat16)             # (out_f, C)
    zt = (z_cat * scale).transpose(0, 2, 1).astype(jnp.bfloat16)   # (N, out_f, Kr)
    bt = jnp.asarray(B.T, dtype=jnp.bfloat16)                  # (Kr, HW)
    shift_col = shift.reshape(out_f, 1).astype(jnp.float32)    # (out_f, 1)

    # Hot path: one fused Pallas call, channel-major in and out.
    x3 = feats_bf.reshape(Nb, C, HW)                           # pure reshape of NCHW
    out3 = fused_bottleneck(x3, wt, bt, zt, shift_col,
                            out_dtype=out_dtype, max_tl=max_tl)
    # (The module's outer self.relu is idempotent after the in-kernel ReLU.)
    return out3.reshape(Nb, out_f, H, W)                       # already NCHW


# Pure-f32 reference with the original (concat) structure, for verification.
def psp_forward_reference(feats, params, sizes=(1, 2, 3, 6)):
    Nb, C, H, W = feats.shape
    priors = []
    for s, (w, scale, shift) in zip(sizes, params["stages"]):
        Ph = adaptive_pool_matrix(H, s)
        Pw = adaptive_pool_matrix(W, s)
        pooled = jnp.einsum("nchw,ph,qw->ncpq", feats, Ph, Pw)
        x2d = pooled.transpose(0, 2, 3, 1).reshape(-1, C)
        y2d = jnp.maximum(jnp.dot(x2d, w) * scale + shift, 0.0)
        y = y2d.reshape(Nb, s, s, C // 4).transpose(0, 3, 1, 2)
        Ah = bilinear_matrix(s, H)
        Aw = bilinear_matrix(s, W)
        priors.append(jnp.einsum("ncpq,hp,wq->nchw", y, Ah, Aw))
    priors.append(feats)
    cat = jnp.concatenate(priors, axis=1)
    x2d = cat.transpose(0, 2, 3, 1).reshape(-1, cat.shape[1])
    y2d = (jnp.dot(x2d, params["bottleneck_w"]) * params["bottleneck_scale"]
           + params["bottleneck_shift"])
    y2d = jnp.maximum(y2d, 0.0)
    out_f = params["bottleneck_w"].shape[1]
    return y2d.reshape(Nb, H, W, out_f).transpose(0, 3, 1, 2)


# TODO(synk): SegmentationNetwork.forward also calls build_backbone, CoarseNet,
# FineNet and a final 512x512 bilinear upsample of their outputs; those class
# definitions are not provided in the reference source, so only the psp4
# (PSPModule) branch — the part fully specified — is implemented here.


if __name__ == "__main__":
    key = jax.random.PRNGKey(0)
    k_feat, k_param = jax.random.split(key)

    # Small, module-consistent shapes: in_features=64 (instead of 2048),
    # out_features=32 (instead of 512), sizes=(1,2,3,6), spatial 16x16.
    N, C, H, W = 2, 64, 16, 16
    OUT_F = 32
    SIZES = (1, 2, 3, 6)

    feats = jax.random.normal(k_feat, (N, C, H, W), jnp.float32)
    params = init_psp_params(k_param, C, OUT_F, SIZES)

    # bf16 output (the downstream CoarseNet convs tolerate it); pass
    # out_dtype=jnp.float32 to keep the exact module output dtype.
    fwd = jax.jit(lambda x: psp_forward(x, params, SIZES, out_dtype=jnp.bfloat16))
    out = fwd(feats)
    jax.block_until_ready(out)

    assert out.shape == (N, OUT_F, H, W), out.shape
    out_f32 = out.astype(jnp.float32)
    assert bool(jnp.all(jnp.isfinite(out_f32)))
    assert bool(jnp.all(out_f32 >= 0.0))  # ReLU output

    # Numerical check vs. the original (concat) structure in pure f32.
    # Relative + absolute tolerance (bf16 operands/output vs f32 reference).
    ref = psp_forward_reference(feats, params, SIZES)
    abs_err = jnp.abs(out_f32 - ref)
    tol = 5e-2 + 2e-2 * jnp.abs(ref)
    max_excess = float(jnp.max(abs_err - tol))
    assert bool(jnp.all(abs_err <= tol)), f"tolerance exceeded by {max_excess}"

    print("KERNEL_OK")
</pallas_src>

<mosaic_0001>
module attributes {stable_mosaic.version = 11 : i64} {
  func.func @_bottleneck_kernel(%arg0: i32, %arg1: i32, %arg2: memref<1x64x256xbf16, #tpu.memory_space<vmem>>, %arg3: memref<32x64xbf16, #tpu.memory_space<vmem>>, %arg4: memref<50x256xbf16, #tpu.memory_space<vmem>>, %arg5: memref<1x32x50xbf16, #tpu.memory_space<vmem>>, %arg6: memref<32x1xf32, #tpu.memory_space<vmem>>, %arg7: memref<1x32x256xbf16, #tpu.memory_space<vmem>>) attributes {dimension_semantics = [#tpu.dimension_semantics<parallel>, #tpu.dimension_semantics<parallel>], iteration_bounds = array<i64: 2, 1>, scalar_prefetch = 0 : i64, scratch_operands = 0 : i64, tpu.core_type = #tpu.core_type<tc>, window_params = [{transform_indices = @transform_0, window_bounds = array<i64: 1, 64, 256>}, {pipeline_mode = #tpu.pipeline_mode<synchronous>, transform_indices = @transform_1, window_bounds = array<i64: 32, 64>}, {transform_indices = @transform_2, window_bounds = array<i64: 50, 256>}, {transform_indices = @transform_3, window_bounds = array<i64: 1, 32, 50>}, {pipeline_mode = #tpu.pipeline_mode<synchronous>, transform_indices = @transform_4, window_bounds = array<i64: 32, 1>}, {transform_indices = @transform_5, window_bounds = array<i64: 1, 32, 256>}]} {
    %c0 = arith.constant 0 : index
    %c0_0 = arith.constant 0 : index
    %0 = vector.load %arg3[%c0, %c0_0] : memref<32x64xbf16, #tpu.memory_space<vmem>>, vector<32x64xbf16>
    %c0_1 = arith.constant 0 : index
    %c0_2 = arith.constant 0 : index
    %c0_3 = arith.constant 0 : index
    %1 = vector.load %arg2[%c0_1, %c0_2, %c0_3] : memref<1x64x256xbf16, #tpu.memory_space<vmem>>, vector<1x64x256xbf16>
    %2 = vector.shape_cast %1 : vector<1x64x256xbf16> to vector<64x256xbf16>
    %cst = arith.constant dense<0.000000e+00> : vector<32x256xf32>
    %3 = tpu.matmul %0, %2, %cst {dimension_numbers = #tpu.dot_dimension_numbers<[1], [0], [0], [1], [0, 0, 1, 1], [], []>} : vector<32x64xbf16>, vector<64x256xbf16>, vector<32x256xf32> -> vector<32x256xf32>
    %c0_4 = arith.constant 0 : index
    %c0_5 = arith.constant 0 : index
    %c0_6 = arith.constant 0 : index
    %4 = vector.load %arg5[%c0_4, %c0_5, %c0_6] : memref<1x32x50xbf16, #tpu.memory_space<vmem>>, vector<1x32x50xbf16>
    %5 = vector.shape_cast %4 : vector<1x32x50xbf16> to vector<32x50xbf16>
    %c0_7 = arith.constant 0 : index
    %c0_8 = arith.constant 0 : index
    %6 = vector.load %arg4[%c0_7, %c0_8] : memref<50x256xbf16, #tpu.memory_space<vmem>>, vector<50x256xbf16>
    %cst_9 = arith.constant dense<0.000000e+00> : vector<32x256xf32>
    %7 = tpu.matmul %5, %6, %cst_9 {dimension_numbers = #tpu.dot_dimension_numbers<[1], [0], [0], [1], [0, 0, 1, 1], [], []>} : vector<32x50xbf16>, vector<50x256xbf16>, vector<32x256xf32> -> vector<32x256xf32>
    %8 = arith.addf %3, %7 : vector<32x256xf32>
    %c0_10 = arith.constant 0 : index
    %c0_11 = arith.constant 0 : index
    %9 = vector.load %arg6[%c0_10, %c0_11] : memref<32x1xf32, #tpu.memory_space<vmem>>, vector<32x1xf32>
    %10 = vector.broadcast %9 : vector<32x1xf32> to vector<32x256xf32>
    %11 = arith.addf %8, %10 : vector<32x256xf32>
    %cst_12 = arith.constant 0.000000e+00 : f32
    %12 = vector.broadcast %cst_12 : f32 to vector<32x256xf32>
    %13 = arith.maximumf %11, %12 : vector<32x256xf32>
    %14 = arith.truncf %13 : vector<32x256xf32> to vector<32x256xbf16>
    %c0_13 = arith.constant 0 : index
    %c0_14 = arith.constant 0 : index
    %c0_15 = arith.constant 0 : index
    %15 = vector.load %arg7[%c0_13, %c0_14, %c0_15] : memref<1x32x256xbf16, #tpu.memory_space<vmem>>, vector<1x32x256xbf16>
    %16 = vector.shape_cast %15 : vector<1x32x256xbf16> to vector<32x256xbf16>
    %17 = vector.shape_cast %14 : vector<32x256xbf16> to vector<1x32x256xbf16>
    tpu.vector_store %arg7[%c0_13, %c0_14, %c0_15], %17 {strides = array<i32>} : memref<1x32x256xbf16, #tpu.memory_space<vmem>>, vector<1x32x256xbf16>,
    return
  }
  func.func @transform_0(%arg0: i32, %arg1: i32) -> (i32, i32, i32) {
    %c0_i32 = arith.constant 0 : i32
    %c0_i32_0 = arith.constant 0 : i32
    return %arg0, %c0_i32, %arg1 : i32, i32, i32
  }
  func.func @transform_1(%arg0: i32, %arg1: i32) -> (i32, i32) {
    %c0_i32 = arith.constant 0 : i32
    %c0_i32_0 = arith.constant 0 : i32
    %c0_i32_1 = arith.constant 0 : i32
    return %c0_i32, %c0_i32_0 : i32, i32
  }
  func.func @transform_2(%arg0: i32, %arg1: i32) -> (i32, i32) {
    %c0_i32 = arith.constant 0 : i32
    %c0_i32_0 = arith.constant 0 : i32
    return %c0_i32, %arg1 : i32, i32
  }
  func.func @transform_3(%arg0: i32, %arg1: i32) -> (i32, i32, i32) {
    %c0_i32 = arith.constant 0 : i32
    %c0_i32_0 = arith.constant 0 : i32
    %c0_i32_1 = arith.constant 0 : i32
    return %arg0, %c0_i32, %c0_i32_0 : i32, i32, i32
  }
  func.func @transform_4(%arg0: i32, %arg1: i32) -> (i32, i32) {
    %c0_i32 = arith.constant 0 : i32
    %c0_i32_0 = arith.constant 0 : i32
    %c0_i32_1 = arith.constant 0 : i32
    return %c0_i32, %c0_i32_0 : i32, i32
  }
  func.func @transform_5(%arg0: i32, %arg1: i32) -> (i32, i32, i32) {
    %c0_i32 = arith.constant 0 : i32
    %c0_i32_0 = arith.constant 0 : i32
    return %arg0, %c0_i32, %arg1 : i32, i32, i32
  }
}

</mosaic_0001>

<llo_original>
// kernel: _lambda_.1
$region0: #{_lambda_.1}
  #allocation0 [shape = 'u32[]', space=smem, size = 0x4, offset = 0x4, fixed_abs, tag = 'smem constant byte address 0x4 - core index']
  #allocation1 [shape = 'u32[72,128]{1,0:T(1,128)}', space=vmem, size = 0x9000, scoped, tag = 'internal scratch']
  %s0 = inlined_call_operand.vmem [shape: bf16[2,64,256], index: 0, kind: input, shape index: {}]
  %s1 = inlined_call_operand.vmem [shape: bf16[32,64], index: 1, kind: input, shape index: {}]
  %s2 = inlined_call_operand.vmem [shape: bf16[50,256], index: 2, kind: input, shape index: {}]
  %s3 = inlined_call_operand.vmem [shape: bf16[2,32,50], index: 3, kind: input, shape index: {}]
  %s4 = inlined_call_operand.vmem [shape: f32[32,1], index: 4, kind: input, shape index: {}]
  %s5 = inlined_call_operand.vmem [shape: bf16[2,32,256], index: 5, kind: output, shape index: {}]
  %s6 = sld [smem:[#allocation0]]
  $region53: #{_lambda_.1} parent=0
    _
  %s8 = ssub.s32 1, %s6
  %s9 = scalar_select 0, %s8, %s6
  loop: start=0, step=1, limit=4
  $region2: #{_lambda_.1} parent=0 // loop_pre_header
    _
  $region3: #{_lambda_.1} parent=0 // loop_header
    %s11 = sphi 0, %s15
    %p12 = scmp.ge.s32.totalorder %s11, 4
    %s18 = sphi 0, %s30
    %s19 = sphi 0, %s26
    %s20 = sphi 0, %s18
    %s21 = sphi 0, %s19
    %s22 = sphi 0, %s20
    %s23 = sphi 0, %s21
    %s35 = sphi 0, %s37
    %s38 = sphi 0, %s35
    %s39 = sphi 0, %s38
    %s55 = sphi 0, %s39
    %s59 = sphi 0, %s59
    %s61 = sphi 0, %s59
    %s62 = sphi 0, %s61
    %s76 = sphi 0, %s62
    %s82 = sphi 0, %s84
    %s85 = sphi 0, %s82
    %s86 = sphi 0, %s85
    %s102 = sphi 0, %s86
    %s108 = sphi 0, %s110
    %s111 = sphi 0, %s108
    %s112 = sphi 0, %s111
    %s128 = sphi 0, %s112
    %s132 = sphi 0, %s132
    %s134 = sphi 0, %s132
    %s135 = sphi 0, %s134
    %s149 = sphi 0, %s135
    %s157 = sphi 0, %s159
    %s160 = sphi 0, %s157
    %s161 = sphi 0, %s160
    %s177 = sphi 0, %s161
  $region4: #{_lambda_.1} parent=0 // loop_header_branch
    %14 = sbr.rel (%p12) target = $region8
  $region5: #{_lambda_.1} parent=0 // loop_body
    %s16 = ssub.s32 %s11, 1
    %s17 = ssub.s32 %s11, 2
    %s24 = sadd.s32 1, %s19
    %p25 = scmp.ge.s32.totalorder %s24, 1
    %s26 = scalar_select %p25, 0, %s24
    %s27 = sadd.s32 1, %s18
    %s28 = scalar_select %p25, %s27, %s18
    %p29 = scmp.ge.s32.totalorder %s28, 2
    %s30 = scalar_select %p29, 0, %s28
    %s31 = ssub.s32 %s18, %s30
    %s32 = ssub.s32 %s19, %s26
    %s33 = sor.u32 %s31, %s32
    %p34 = scmp.eq.s32.totalorder %s33, 0
    %s36 = sadd.s32 %s35, 1
    %s37 = scalar_select %p34, %s35, %s36
    %p40 = pneg %p34
    %p41 = scmp.eq.s32.totalorder %s11, 1
    %p42 = por %p40, %p41
    %p43 = scmp.ne.s32.totalorder %s35, %s38
    %p44 = scmp.eq.s32.totalorder %s11, 0
    %p45 = por %p43, %p44
    %p46 = scmp.ne.s32.totalorder %s35, %s38
    %p47 = scmp.eq.s32.totalorder %s16, 1
    %p48 = por %p46, %p47
    %p49 = scmp.ne.s32.totalorder %s38, %s39
    %p50 = scmp.eq.s32.totalorder %s16, 0
    %p51 = por %p49, %p50
    %p52 = scmp.ne.s32.totalorder %s38, %s39
    %p53 = scmp.eq.s32.totalorder %s17, 1
    %p54 = por %p52, %p53
    %p56 = scmp.ne.s32.totalorder %s39, %s55
    %p57 = scmp.eq.s32.totalorder %s17, 0
    %p58 = por %p56, %p57
    %s60 = sadd.s32 %s59, 1
    %p63 = scmp.eq.s32.totalorder %s11, 1
    %p64 = scmp.ne.s32.totalorder %s59, %s61
    %p65 = scmp.eq.s32.totalorder %s11, 0
    %p66 = por %p64, %p65
    %p67 = scmp.ne.s32.totalorder %s59, %s61
    %p68 = scmp.eq.s32.totalorder %s16, 1
    %p69 = por %p67, %p68
    %p70 = scmp.ne.s32.totalorder %s61, %s62
    %p71 = scmp.eq.s32.totalorder %s16, 0
    %p72 = por %p70, %p71
    %p73 = scmp.ne.s32.totalorder %s61, %s62
    %p74 = scmp.eq.s32.totalorder %s17, 1
    %p75 = por %p73, %p74
    %p77 = scmp.ne.s32.totalorder %s62, %s76
    %p78 = scmp.eq.s32.totalorder %s17, 0
    %p79 = por %p77, %p78
    %s80 = ssub.s32 %s19, %s26
    %p81 = scmp.eq.s32.totalorder %s80, 0
    %s83 = sadd.s32 %s82, 1
    %s84 = scalar_select %p81, %s82, %s83
    %p87 = pneg %p81
    %p88 = scmp.eq.s32.totalorder %s11, 1
    %p89 = por %p87, %p88
    %p90 = scmp.ne.s32.totalorder %s82, %s85
    %p91 = scmp.eq.s32.totalorder %s11, 0
    %p92 = por %p90, %p91
    %p93 = scmp.ne.s32.totalorder %s82, %s85
    %p94 = scmp.eq.s32.totalorder %s16, 1
    %p95 = por %p93, %p94
    %p96 = scmp.ne.s32.totalorder %s85, %s86
    %p97 = scmp.eq.s32.totalorder %s16, 0
    %p98 = por %p96, %p97
    %p99 = scmp.ne.s32.totalorder %s85, %s86
    %p100 = scmp.eq.s32.totalorder %s17, 1
    %p101 = por %p99, %p100
    %p103 = scmp.ne.s32.totalorder %s86, %s102
    %p104 = scmp.eq.s32.totalorder %s17, 0
    %p105 = por %p103, %p104
    %s106 = ssub.s32 %s18, %s30
    %p107 = scmp.eq.s32.totalorder %s106, 0
    %s109 = sadd.s32 %s108, 1
    %s110 = scalar_select %p107, %s108, %s109
    %p113 = pneg %p107
    %p114 = scmp.eq.s32.totalorder %s11, 1
    %p115 = por %p113, %p114
    %p116 = scmp.ne.s32.totalorder %s108, %s111
    %p117 = scmp.eq.s32.totalorder %s11, 0
    %p118 = por %p116, %p117
    %p119 = scmp.ne.s32.totalorder %s108, %s111
    %p120 = scmp.eq.s32.totalorder %s16, 1
    %p121 = por %p119, %p120
    %p122 = scmp.ne.s32.totalorder %s111, %s112
    %p123 = scmp.eq.s32.totalorder %s16, 0
    %p124 = por %p122, %p123
    %p125 = scmp.ne.s32.totalorder %s111, %s112
    %p126 = scmp.eq.s32.totalorder %s17, 1
    %p127 = por %p125, %p126
    %p129 = scmp.ne.s32.totalorder %s112, %s128
    %p130 = scmp.eq.s32.totalorder %s17, 0
    %p131 = por %p129, %p130
    %s133 = sadd.s32 %s132, 1
    %p136 = scmp.eq.s32.totalorder %s11, 1
    %p137 = scmp.ne.s32.totalorder %s132, %s134
    %p138 = scmp.eq.s32.totalorder %s11, 0
    %p139 = por %p137, %p138
    %p140 = scmp.ne.s32.totalorder %s132, %s134
    %p141 = scmp.eq.s32.totalorder %s16, 1
    %p142 = por %p140, %p141
    %p143 = scmp.ne.s32.totalorder %s134, %s135
    %p144 = scmp.eq.s32.totalorder %s16, 0
    %p145 = por %p143, %p144
    %p146 = scmp.ne.s32.totalorder %s134, %s135
    %p147 = scmp.eq.s32.totalorder %s17, 1
    %p148 = por %p146, %p147
    %p150 = scmp.ne.s32.totalorder %s135, %s149
    %p151 = scmp.eq.s32.totalorder %s17, 0
    %p152 = por %p150, %p151
    %s153 = ssub.s32 %s18, %s30
    %s154 = ssub.s32 %s19, %s26
    %s155 = sor.u32 %s153, %s154
    %p156 = scmp.eq.s32.totalorder %s155, 0
    %s158 = sadd.s32 %s157, 1
    %s159 = scalar_select %p156, %s157, %s158
    %p162 = pneg %p156
    %p163 = scmp.eq.s32.totalorder %s11, 1
    %p164 = por %p162, %p163
    %p165 = scmp.ne.s32.totalorder %s157, %s160
    %p166 = scmp.eq.s32.totalorder %s11, 0
    %p167 = por %p165, %p166
    %p168 = scmp.ne.s32.totalorder %s157, %s160
    %p169 = scmp.eq.s32.totalorder %s16, 1
    %p170 = por %p168, %p169
    %p171 = scmp.ne.s32.totalorder %s160, %s161
    %p172 = scmp.eq.s32.totalorder %s16, 0
    %p173 = por %p171, %p172
    %p174 = scmp.ne.s32.totalorder %s160, %s161
    %p175 = scmp.eq.s32.totalorder %s17, 1
    %p176 = por %p174, %p175
    %p178 = scmp.ne.s32.totalorder %s161, %s177
    %p179 = scmp.eq.s32.totalorder %s17, 0
    %p180 = por %p178, %p179
    %p181 = scmp.le.s32.totalorder 1, %s11
    %p182 = scmp.lt.s32.totalorder %s11, 3
    %p183 = pnand %p181, %p182
    %p184 = pneg %p183
    // Predicated region
    $region9: #{_lambda_.1} parent=5 // pred_check
      _
    $region10: #{_lambda_.1} parent=5 // pred_check_branch
      %186 = sbr.rel (%p183) target = $region12
    $region11: #{_lambda_.1} parent=5 // pred_region
      %s187 = ssub.s32 %s11, 1
      // Predicated region
      $region13: #{_lambda_.1} parent=11 // pred_check
        %p188 = pneg %p72
      $region14: #{_lambda_.1} parent=11 // pred_check_branch
        %190 = sbr.rel (%p188) target = $region16
      $region15: #{_lambda_.1} parent=11 // pred_region
        _
      $region16: #{_lambda_.1} parent=11 // pred_fallthru
        _
      // Predicated region
      $region17: #{_lambda_.1} parent=11 // pred_check
        %p191 = pneg %p98
      $region18: #{_lambda_.1} parent=11 // pred_check_branch
        %193 = sbr.rel (%p191) target = $region20
      $region19: #{_lambda_.1} parent=11 // pred_region
        %s194 = smul.u32 2, %s21
        %p195 = scmp.lt.s32.totalorder %s194, 1
        %s196 = scalar_select %p195, %s194, 1
        %s197 = smul.addr %s196, 4
        %s198 = scalar_lea.vmem %s2, %s197
        %s199 = smul.u32 2, %s21
      $region20: #{_lambda_.1} parent=11 // pred_fallthru
        _
      // Predicated region
      $region21: #{_lambda_.1} parent=11 // pred_check
        %p200 = pneg %p145
      $region22: #{_lambda_.1} parent=11 // pred_check_branch
        %202 = sbr.rel (%p200) target = $region24
      $region23: #{_lambda_.1} parent=11 // pred_region
        _
      $region24: #{_lambda_.1} parent=11 // pred_fallthru
        _
    $region12: #{_lambda_.1} parent=5 // pred_fallthru
      _
    %p203 = scmp.lt.s32.totalorder %s11, 2
    // Predicated region
    $region25: #{_lambda_.1} parent=5 // pred_check
      %p204 = pneg %p203
    $region26: #{_lambda_.1} parent=5 // pred_check_branch
      %206 = sbr.rel (%p204) target = $region28
    $region27: #{_lambda_.1} parent=5 // pred_region
      // Predicated region
      $region29: #{_lambda_.1} parent=27 // pred_check
        %p207 = pneg %p45
      $region30: #{_lambda_.1} parent=27 // pred_check_branch
        %209 = sbr.rel (%p207) target = $region32
      $region31: #{_lambda_.1} parent=27 // pred_region
        %s210 = smul.u32 2, %s19
        %p211 = scmp.lt.s32.totalorder %s18, 1
        %s212 = scalar_select %p211, %s18, 1
        %p213 = scmp.lt.s32.totalorder %s210, 1
        %s214 = scalar_select %p213, %s210, 1
        %s215 = smul.addr %s212, 16
        %s216 = sadd.s32 %s214, %s215
        %s217 = smul.addr %s216, 4
        %s218 = scalar_lea.vmem %s0, %s217
        %s219 = smul.u32 2, %s19
      $region32: #{_lambda_.1} parent=27 // pred_fallthru
        _
      // Predicated region
      $region33: #{_lambda_.1} parent=27 // pred_check
        %p220 = pneg %p118
      $region34: #{_lambda_.1} parent=27 // pred_check_branch
        %222 = sbr.rel (%p220) target = $region36
      $region35: #{_lambda_.1} parent=27 // pred_region
        %p223 = scmp.lt.s32.totalorder %s18, 1
        %s224 = scalar_select %p223, %s18, 1
        %s225 = smul.addr %s224, 4
        %s226 = smul.addr %s225, 4
        %s227 = scalar_lea.vmem %s3, %s226
      $region36: #{_lambda_.1} parent=27 // pred_fallthru
        _
    $region28: #{_lambda_.1} parent=5 // pred_fallthru
      _
    %p228 = scmp.le.s32.totalorder 1, %s11
    %p229 = scmp.lt.s32.totalorder %s11, 3
    %p230 = pnand %p228, %p229
    %p231 = pneg %p230
    // Predicated region
    $region37: #{_lambda_.1} parent=5 // pred_check
      _
    $region38: #{_lambda_.1} parent=5 // pred_check_branch
      %233 = sbr.rel (%p230) target = $region40
    $region39: #{_lambda_.1} parent=5 // pred_region
      %s234 = ssub.s32 %s11, 1
      %s235 = smul.u32 2, %s21
      %p236 = scmp.lt.s32.totalorder %s20, 1
      %s237 = scalar_select %p236, %s20, 1
      %p238 = scmp.lt.s32.totalorder %s235, 1
      %s239 = scalar_select %p238, %s235, 1
      %s240 = smul.addr %s237, 16
      %s241 = sadd.s32 %s239, %s240
      %s242 = smul.addr %s241, 4
      %s243 = scalar_lea.vmem %s0, %s242
      %p244 = pneg %p51
      %p245 = pneg %p48
      %p246 = pneg %p72
      %p247 = pneg %p69
      %s248 = smul.u32 2, %s21
      %p249 = scmp.lt.s32.totalorder %s248, 1
      %s250 = scalar_select %p249, %s248, 1
      %s251 = smul.addr %s250, 4
      %s252 = scalar_lea.vmem %s2, %s251
      %p253 = pneg %p98
      %p254 = pneg %p95
      %p255 = scmp.lt.s32.totalorder %s20, 1
      %s256 = scalar_select %p255, %s20, 1
      %s257 = smul.addr %s256, 4
      %s258 = smul.addr %s257, 4
      %s259 = scalar_lea.vmem %s3, %s258
      %p260 = pneg %p124
      %p261 = pneg %p121
      %p262 = pneg %p145
      %p263 = pneg %p142
      %p264 = pneg %p173
      %p265 = pneg %p170
      %s266 = smul.u32 2, %s21
      %p267 = scmp.lt.s32.totalorder %s20, 1
      %s268 = scalar_select %p267, %s20, 1
      %p269 = scmp.lt.s32.totalorder %s266, 1
      %s270 = scalar_select %p269, %s266, 1
      %s271 = smul.addr %s268, 8
      %s272 = sadd.s32 %s270, %s271
      %s273 = smul.addr %s272, 4
      %s274 = scalar_lea.vmem %s5, %s273
      %s275 = smul.u32 2, %s21
      %p276 = scmp.lt.s32.totalorder %s20, 1
      %s277 = scalar_select %p276, %s20, 1
      %p278 = scmp.lt.s32.totalorder %s275, 1
      %s279 = scalar_select %p278, %s275, 1
      %s280 = smul.addr %s277, 16
      %s281 = sadd.s32 %s279, %s280
      %s282 = smul.addr %s281, 4
      %s283 = scalar_lea.vmem %s0, %s282
      %s284 = smul.u32 2, %s21
      %s285 = smul.u32 2, %s21
      %p286 = scmp.lt.s32.totalorder %s285, 1
      %s287 = scalar_select %p286, %s285, 1
      %s288 = smul.addr %s287, 4
      %s289 = scalar_lea.vmem %s2, %s288
      %s290 = smul.u32 2, %s21
      %p291 = scmp.lt.s32.totalorder %s20, 1
      %s292 = scalar_select %p291, %s20, 1
      %s293 = smul.addr %s292, 4
      %s294 = smul.addr %s293, 4
      %s295 = scalar_lea.vmem %s3, %s294
      %s296 = smul.u32 2, %s21
      %p297 = scmp.lt.s32.totalorder %s20, 1
      %s298 = scalar_select %p297, %s20, 1
      %p299 = scmp.lt.s32.totalorder %s296, 1
      %s300 = scalar_select %p299, %s296, 1
      %s301 = smul.addr %s298, 8
      %s302 = sadd.s32 %s300, %s301
      %s303 = smul.addr %s302, 4
      %s304 = scalar_lea.vmem %s5, %s303
      %s305 = smul.u32 2, %s21
      %v307 = vld [vmem:[%s1] sm:$0xf]
      %v308 = vld [vmem:[%s1 + $0x4] sm:$0xf]
      %v309 = vld [vmem:[%s1 + $0x8] sm:$0xf]
      %v310 = vld [vmem:[%s1 + $0xc] sm:$0xf]
      %v311 = vld [vmem:[%s283] sm:$0xff]
      %v312 = vld [vmem:[%s283 + $0x8] sm:$0xff]
      %v313 = vld [vmem:[%s283 + $0x10] sm:$0xff]
      %v314 = vld [vmem:[%s283 + $0x18] sm:$0xff]
      %v315 = vld [vmem:[%s283 + $0x20] sm:$0xff]
      %v316 = vld [vmem:[%s283 + $0x28] sm:$0xff]
      %v317 = vld [vmem:[%s283 + $0x30] sm:$0xff]
      %v318 = vld [vmem:[%s283 + $0x38] sm:$0xff]
      %v319 = vld [vmem:[%s295] sm:$0xf]
      %v320 = vld [vmem:[%s295 + $0x4] sm:$0xf]
      %v321 = vld [vmem:[%s295 + $0x8] sm:$0xf]
      %v322 = vld [vmem:[%s295 + $0xc] sm:$0xf]
      %v323 = vld [vmem:[%s289] sm:$0xff]
      %v324 = vld [vmem:[%s289 + $0x8] sm:$0xff]
      %v325 = vld [vmem:[%s289 + $0x10] sm:$0xff]
      %v326 = vld [vmem:[%s289 + $0x18] sm:$0xff]
      %v327 = vld [vmem:[%s289 + $0x20] sm:$0xff]
      %v328 = vld [vmem:[%s289 + $0x28] sm:$0xff]
      %v329 = vld [vmem:[%s289 + $0x30] sm:$0x11]
      %v334 = vunpack.c.l.b16 %v319
      %v335 = vunpack.c.l.b16 %v320
      %v336 = vunpack.c.l.b16 %v321
      %v337 = vunpack.c.l.b16 %v322
      %v338 = vpack.c.b16 %v335, %v334
      %v339 = vpack.c.b16 %v337, %v336
      %v347 = vunpack.c.l.b16 %v323
      %v348 = vunpack.c.h.b16 %v323
      %v349 = vunpack.c.l.b16 %v324
      %v350 = vunpack.c.h.b16 %v324
      %v351 = vunpack.c.l.b16 %v325
      %v352 = vunpack.c.h.b16 %v325
      %v353 = vunpack.c.l.b16 %v326
      %v354 = vunpack.c.h.b16 %v326
      %v355 = vunpack.c.l.b16 %v327
      %v356 = vunpack.c.h.b16 %v327
      %v357 = vunpack.c.l.b16 %v328
      %v358 = vunpack.c.h.b16 %v328
      %v359 = vunpack.c.l.b16 %v329
      %v360 = vunpack.c.h.b16 %v329
      %v361 = vpack.c.b16 %v349, %v347
      %v362 = vpack.c.b16 %v350, %v348
      %v363 = vpack.c.b16 %v353, %v351
      %v364 = vpack.c.b16 %v354, %v352
      %v365 = vpack.c.b16 %v357, %v355
      %v366 = vpack.c.b16 %v358, %v356
      %v367 = vpack.c.b16 %v359, %v359
      %v368 = vpack.c.b16 %v360, %v360
      %vm375 = vcmask 408576
      %v377 = vsel %vm375, %v338, 0
      %v380 = vsel %vm375, %v339, 0
      %vm382 = vcmask 1040384
      %v384 = vsel %vm382, %v367, 0
      %v387 = vsel %vm382, %v368, 0
      %389 = vmatpush.bf16.msra.mxu0 0
      %390 = vmatpush.bf16.msra.mxu0 0
      %391 = vmatpush.bf16.msra.mxu0 0
      %392 = vmatpush.bf16.msra.mxu0 0
      %393 = vmatpush.bf16.msra.mxu0 %v384
      %394 = vmatpush.bf16.msra.mxu0 %v365
      %395 = vmatpush.bf16.msra.mxu0 %v363
      %396 = vmatpush.bf16.msra.mxu0 %v361
      %397 = vmatmul.bf16.gmra.mxu0 %v377
      %v398 = vpop.f32.mrf.mxu0
      %v399 = vadd.f32 0.0, %v398
      %v400 = vpop.f32.mrf.mxu0
      %v401 = vadd.f32 0.0, %v400
      %402 = vmatmul.bf16.gmra.mxu0 %v380
      %v403 = vpop.f32.mrf.mxu0
      %v404 = vadd.f32 0.0, %v403
      %v405 = vpop.f32.mrf.mxu0
      %v406 = vadd.f32 0.0, %v405
      %407 = vdwg.mxu0
      %408 = vmatpush.bf16.msra.mxu0 0
      %409 = vmatpush.bf16.msra.mxu0 0
      %410 = vmatpush.bf16.msra.mxu0 0
      %411 = vmatpush.bf16.msra.mxu0 0
      %412 = vmatpush.bf16.msra.mxu0 %v387
      %413 = vmatpush.bf16.msra.mxu0 %v366
      %414 = vmatpush.bf16.msra.mxu0 %v364
      %415 = vmatpush.bf16.msra.mxu0 %v362
      %416 = vmatmul.bf16.gmra.mxu0 %v377
      %v417 = vpop.f32.mrf.mxu0
      %v418 = vadd.f32 0.0, %v417
      %v419 = vpop.f32.mrf.mxu0
      %v420 = vadd.f32 0.0, %v419
      %421 = vmatmul.bf16.gmra.mxu0 %v380
      %v422 = vpop.f32.mrf.mxu0
      %v423 = vadd.f32 0.0, %v422
      %v424 = vpop.f32.mrf.mxu0
      %v425 = vadd.f32 0.0, %v424
      %426 = vdwg.mxu0
      %v431 = vunpack.c.l.b16 %v307
      %v432 = vunpack.c.l.b16 %v308
      %v433 = vunpack.c.l.b16 %v309
      %v434 = vunpack.c.l.b16 %v310
      %v435 = vpack.c.b16 %v432, %v431
      %v436 = vpack.c.b16 %v434, %v433
      %v445 = vunpack.c.l.b16 %v311
      %v446 = vunpack.c.h.b16 %v311
      %v447 = vunpack.c.l.b16 %v312
      %v448 = vunpack.c.h.b16 %v312
      %v449 = vunpack.c.l.b16 %v313
      %v450 = vunpack.c.h.b16 %v313
      %v451 = vunpack.c.l.b16 %v314
      %v452 = vunpack.c.h.b16 %v314
      %v453 = vunpack.c.l.b16 %v315
      %v454 = vunpack.c.h.b16 %v315
      %v455 = vunpack.c.l.b16 %v316
      %v456 = vunpack.c.h.b16 %v316
      %v457 = vunpack.c.l.b16 %v317
      %v458 = vunpack.c.h.b16 %v317
      %v459 = vunpack.c.l.b16 %v318
      %v460 = vunpack.c.h.b16 %v318
      %v461 = vpack.c.b16 %v447, %v445
      %v462 = vpack.c.b16 %v448, %v446
      %v463 = vpack.c.b16 %v451, %v449
      %v464 = vpack.c.b16 %v452, %v450
      %v465 = vpack.c.b16 %v455, %v453
      %v466 = vpack.c.b16 %v456, %v454
      %v467 = vpack.c.b16 %v459, %v457
      %v468 = vpack.c.b16 %v460, %v458
      %vm477 = vcmask 523264
      %v479 = vsel %vm477, %v435, 0
      %v482 = vsel %vm477, %v436, 0
      %484 = vmatpush.bf16.msra.mxu0 0
      %485 = vmatpush.bf16.msra.mxu0 0
      %486 = vmatpush.bf16.msra.mxu0 0
      %487 = vmatpush.bf16.msra.mxu0 0
      %488 = vmatpush.bf16.msra.mxu0 %v467
      %489 = vmatpush.bf16.msra.mxu0 %v465
      %490 = vmatpush.bf16.msra.mxu0 %v463
      %491 = vmatpush.bf16.msra.mxu0 %v461
      %492 = vmatmul.bf16.gmra.mxu0 %v479
      %v493 = vpop.f32.mrf.mxu0
      %v494 = vadd.f32 %v399, %v493
      %v495 = vpop.f32.mrf.mxu0
      %v496 = vadd.f32 %v401, %v495
      %497 = vmatmul.bf16.gmra.mxu0 %v482
      %v498 = vpop.f32.mrf.mxu0
      %v499 = vadd.f32 %v404, %v498
      %v500 = vpop.f32.mrf.mxu0
      %v501 = vadd.f32 %v406, %v500
      %502 = vdwg.mxu0
      %503 = vmatpush.bf16.msra.mxu0 0
      %504 = vmatpush.bf16.msra.mxu0 0
      %505 = vmatpush.bf16.msra.mxu0 0
      %506 = vmatpush.bf16.msra.mxu0 0
      %507 = vmatpush.bf16.msra.mxu0 %v468
      %508 = vmatpush.bf16.msra.mxu0 %v466
      %509 = vmatpush.bf16.msra.mxu0 %v464
      %510 = vmatpush.bf16.msra.mxu0 %v462
      %511 = vmatmul.bf16.gmra.mxu0 %v479
      %v512 = vpop.f32.mrf.mxu0
      %v513 = vadd.f32 %v418, %v512
      %v514 = vpop.f32.mrf.mxu0
      %v515 = vadd.f32 %v420, %v514
      %516 = vmatmul.bf16.gmra.mxu0 %v482
      %v517 = vpop.f32.mrf.mxu0
      %v518 = vadd.f32 %v423, %v517
      %v519 = vpop.f32.mrf.mxu0
      %v520 = vadd.f32 %v425, %v519
      %521 = vdwg.mxu0
      %v522 = vld [vmem:[%s4] sm:$0xff]
      %v523 = vld [vmem:[%s4 + $0x8] sm:$0xff]
      %v524 = vld [vmem:[%s4 + $0x10] sm:$0xff]
      %v525 = vld [vmem:[%s4 + $0x18] sm:$0xff]
      %527 = vset.pattern.permute.xlu0 0
      %528 = vperm.xlu0 %527, %v522
      %v529 = vpop.permute.xlu0 %528
      %532 = vset.pattern.permute.xlu0 0
      %533 = vperm.xlu0 %532, %v523
      %v534 = vpop.permute.xlu0 %533
      %537 = vset.pattern.permute.xlu0 0
      %538 = vperm.xlu0 %537, %v524
      %v539 = vpop.permute.xlu0 %538
      %542 = vset.pattern.permute.xlu0 0
      %543 = vperm.xlu0 %542, %v525
      %v544 = vpop.permute.xlu0 %543
      %v546 = vadd.f32 %v494, %v529
      %v547 = vadd.f32 %v513, %v529
      %v548 = vadd.f32 %v496, %v534
      %v549 = vadd.f32 %v515, %v534
      %v550 = vadd.f32 %v499, %v539
      %v551 = vadd.f32 %v518, %v539
      %v552 = vadd.f32 %v501, %v544
      %v553 = vadd.f32 %v520, %v544
      %v554 = vmax.f32 %v546, 0.0
      %v555 = vmax.f32 %v547, 0.0
      %v556 = vmax.f32 %v548, 0.0
      %v557 = vmax.f32 %v549, 0.0
      %v558 = vmax.f32 %v550, 0.0
      %v559 = vmax.f32 %v551, 0.0
      %v560 = vmax.f32 %v552, 0.0
      %v561 = vmax.f32 %v553, 0.0
      %v562 = vpack.c.bf16 %v555, %v554
      %v563 = vpack.c.bf16 %v557, %v556
      %v564 = vpack.c.bf16 %v559, %v558
      %v565 = vpack.c.bf16 %v561, %v560
      %566 = vst [vmem:[%s304] sm:$0xff] %v562
      %567 = vst [vmem:[%s304 + $0x8] sm:$0xff] %v563
      %568 = vst [vmem:[%s304 + $0x10] sm:$0xff] %v564
      %569 = vst [vmem:[%s304 + $0x18] sm:$0xff] %v565
      %s570 = smul.u32 2, %s21
      %p571 = scmp.lt.s32.totalorder %s20, 1
      %s572 = scalar_select %p571, %s20, 1
      %p573 = scmp.lt.s32.totalorder %s570, 1
      %s574 = scalar_select %p573, %s570, 1
      %s575 = smul.addr %s572, 8
      %s576 = sadd.s32 %s574, %s575
      %s577 = smul.addr %s576, 4
      %s578 = scalar_lea.vmem %s5, %s577
      // Predicated region
      $region41: #{_lambda_.1} parent=39 // pred_check
        %p579 = pneg %p170
      $region42: #{_lambda_.1} parent=39 // pred_check_branch
        %581 = sbr.rel (%p579) target = $region44
      $region43: #{_lambda_.1} parent=39 // pred_region
        %s582 = smul.u32 2, %s21
      $region44: #{_lambda_.1} parent=39 // pred_fallthru
        _
    $region40: #{_lambda_.1} parent=5 // pred_fallthru
      _
    %p583 = scmp.le.s32.totalorder 2, %s11
    // Predicated region
    $region45: #{_lambda_.1} parent=5 // pred_check
      %p584 = pneg %p583
    $region46: #{_lambda_.1} parent=5 // pred_check_branch
      %586 = sbr.rel (%p584) target = $region48
    $region47: #{_lambda_.1} parent=5 // pred_region
      %s587 = ssub.s32 %s11, 2
      // Predicated region
      $region49: #{_lambda_.1} parent=47 // pred_check
        %p588 = pneg %p176
      $region50: #{_lambda_.1} parent=47 // pred_check_branch
        %590 = sbr.rel (%p588) target = $region52
      $region51: #{_lambda_.1} parent=47 // pred_region
        %s591 = smul.u32 2, %s23
        %p592 = scmp.lt.s32.totalorder %s22, 1
        %s593 = scalar_select %p592, %s22, 1
        %p594 = scmp.lt.s32.totalorder %s591, 1
        %s595 = scalar_select %p594, %s591, 1
        %s596 = smul.addr %s593, 8
        %s597 = sadd.s32 %s595, %s596
        %s598 = smul.addr %s597, 4
        %s599 = scalar_lea.vmem %s5, %s598
      $region52: #{_lambda_.1} parent=47 // pred_fallthru
        _
    $region48: #{_lambda_.1} parent=5 // pred_fallthru
      _
  $region6: #{_lambda_.1} parent=0 // loop_footer
    %s15 = sadd.s32 1, %s11
  $region7: #{_lambda_.1} parent=0 // loop_footer_branch
    %10 = sbr.rel target = $region3
  $region8: #{_lambda_.1} parent=0 // loop_exit
    _

</llo_original>
